<compile_context>
chip_gen: v5e
topology: v5e:2x2
jax: 0.10.0
libtpu: 0.0.40
codegen_flags: <defaults>
</compile_context>

<pallas_src>
import functools

import jax
import jax.numpy as jnp
from jax.experimental import pallas as pl
from jax.experimental.pallas import tpu as pltpu


# ---------------------------------------------------------------------------
# helpers
# ---------------------------------------------------------------------------
def _round_up(x: int, m: int) -> int:
    return ((x + m - 1) // m) * m


def _pick_tile(dim: int, target: int, align: int = 128) -> int:
    """Largest multiple of `align` <= target that divides `dim`, else full dim."""
    if dim <= target:
        return dim
    t = (target // align) * align
    while t >= align:
        if dim % t == 0:
            return t
        t -= align
    return dim


def _choose_tk(K: int, tm: int, tn: int, itemsize: int, target: int,
               budget: int) -> int:
    """K tile: prefer one full-K pass (no accumulator revisits, no 128-deep
    matmuls) whenever the double-buffered x/W tiles stay well inside VMEM."""
    if 2 * itemsize * K * (tm + tn) <= budget // 2:
        return K
    return _pick_tile(K, target)


def _gelu(x):
    # tanh-approx GELU: EUP/VPU slots, essentially free next to the MXU work.
    return jax.nn.gelu(x, approximate=True)


def _vmem_capacity_bytes() -> int:
    """Per-core VMEM capacity (128 MiB on v5e/v6e, 64 MiB per TC on v7x)."""
    try:
        cap = int(pltpu.get_tpu_info().vmem_capacity_bytes)
        if cap > 0:
            return cap
    except Exception:
        pass
    return 64 * 1024 * 1024          # conservative fallback (v7x per-TC)


def _vmem_limit_from_capacity(cap: int) -> int:
    # Leave headroom for Mosaic internal scratch.
    return max(32 * 1024 * 1024, min(int(cap * 0.85), cap - (8 << 20)))


def _resident_spec(block_shape) -> pl.BlockSpec:
    """BlockSpec for an operand whose block never changes across the grid.

    Constant index_map => fetched once; with pipeline_mode=pl.Buffered(1) it is
    also allocated only once in VMEM instead of double-buffered.
    """
    index_map = lambda *_: (0,) * len(block_shape)
    try:
        return pl.BlockSpec(block_shape, index_map,
                            pipeline_mode=pl.Buffered(1))
    except (TypeError, AttributeError):
        # Older JAX without BlockSpec.pipeline_mode: plain (double-buffered).
        return pl.BlockSpec(block_shape, index_map)


# ---------------------------------------------------------------------------
# fused path: whole MLP per M-tile, all weights resident in VMEM
# ---------------------------------------------------------------------------
def _fused_mlp_kernel(x_ref, w1_ref, b1_ref, w2_ref, b2_ref, w3_ref, b3_ref,
                      o_ref):
    x = x_ref[...]
    h = jnp.dot(x, w1_ref[...], preferred_element_type=jnp.float32)
    h = _gelu(h + b1_ref[...].astype(jnp.float32))
    h = h.astype(w2_ref.dtype)

    h = jnp.dot(h, w2_ref[...], preferred_element_type=jnp.float32)
    h = _gelu(h + b2_ref[...].astype(jnp.float32))
    h = h.astype(w3_ref.dtype)

    h = jnp.dot(h, w3_ref[...], preferred_element_type=jnp.float32)
    h = h + b3_ref[...].astype(jnp.float32)
    o_ref[...] = h.astype(o_ref.dtype)


def _fused_vmem_estimate(tm, K1, H, D, in_isz, w_isz, out_isz):
    x_blk = 2 * tm * K1 * in_isz                       # activations (2 bufs)
    o_blk = 2 * tm * D * out_isz                       # outputs (2 bufs)
    weights = (K1 * H + H * D + D * D) * w_isz         # resident, 1 buf each
    biases = (H + 2 * D) * 4                           # f32, resident
    interm = (tm * H * (4 + w_isz)                     # f32 h1 + bf16 copy
              + tm * D * (4 + w_isz)                   # f32 h2 + bf16 copy
              + tm * D * 4)                            # f32 h3
    return x_blk + o_blk + weights + biases + interm


def _fused_call(x2d, w1, b1_2d, w2, b2_2d, w3, b3_2d, *, tm, out_dtype,
                vmem_limit):
    M, K1 = x2d.shape
    H = w1.shape[1]
    D = w3.shape[1]

    flops = 2 * M * (K1 * H + H * D + D * D)
    bytes_accessed = (x2d.nbytes + w1.nbytes + w2.nbytes + w3.nbytes
                      + b1_2d.nbytes + b2_2d.nbytes + b3_2d.nbytes
                      + M * D * jnp.dtype(out_dtype).itemsize)

    return pl.pallas_call(
        _fused_mlp_kernel,
        out_shape=jax.ShapeDtypeStruct((M, D), out_dtype),
        grid_spec=pltpu.PrefetchScalarGridSpec(
            num_scalar_prefetch=0,
            grid=(pl.cdiv(M, tm),),
            in_specs=[
                pl.BlockSpec((tm, K1), lambda i: (i, 0)),  # activations stream
                _resident_spec((K1, H)),                   # W1 resident
                _resident_spec((1, H)),
                _resident_spec((H, D)),                    # W2 resident
                _resident_spec((1, D)),
                _resident_spec((D, D)),                    # W3 resident
                _resident_spec((1, D)),
            ],
            out_specs=pl.BlockSpec((tm, D), lambda i: (i, 0)),
        ),
        compiler_params=pltpu.CompilerParams(
            dimension_semantics=("parallel",),
            vmem_limit_bytes=int(vmem_limit)),
        cost_estimate=pl.CostEstimate(
            flops=int(flops),
            transcendentals=int(M * (H + D)),
            bytes_accessed=int(bytes_accessed)),
    )(x2d, w1, b1_2d, w2, b2_2d, w3, b3_2d)


# ---------------------------------------------------------------------------
# tiled path: per-layer (M, N, K)-tiled matmul with f32 accumulator
# ---------------------------------------------------------------------------
def _matmul_bias_act_kernel(x_ref, w_ref, b_ref, o_ref, acc_ref, *, apply_gelu):
    k = pl.program_id(2)

    @pl.when(k == 0)
    def _():
        acc_ref[...] = jnp.zeros_like(acc_ref)

    acc_ref[...] += jnp.dot(x_ref[...], w_ref[...],
                            preferred_element_type=jnp.float32)

    @pl.when(k == pl.num_programs(2) - 1)
    def _():
        y = acc_ref[...] + b_ref[...].astype(jnp.float32)
        if apply_gelu:
            y = _gelu(y)
        o_ref[...] = y.astype(o_ref.dtype)


def _tiled_linear(x2d, w, b2d, *, apply_gelu, out_dtype, tm, tn, tk,
                  budget, vmem_limit):
    M, K = x2d.shape
    N = w.shape[1]
    isz = jnp.dtype(x2d.dtype).itemsize
    tm_eff = min(tm, _round_up(M, 8))
    tn_eff = _pick_tile(N, tn)
    tk_eff = _choose_tk(K, tm_eff, tn_eff, isz, tk, budget)

    kernel = functools.partial(_matmul_bias_act_kernel, apply_gelu=apply_gelu)
    flops = 2 * M * K * N
    bytes_accessed = (x2d.nbytes + w.nbytes + b2d.nbytes
                      + M * N * jnp.dtype(out_dtype).itemsize)

    return pl.pallas_call(
        kernel,
        out_shape=jax.ShapeDtypeStruct((M, N), out_dtype),
        grid_spec=pltpu.PrefetchScalarGridSpec(
            num_scalar_prefetch=0,
            grid=(pl.cdiv(M, tm_eff), N // tn_eff, K // tk_eff),
            in_specs=[
                pl.BlockSpec((tm_eff, tk_eff), lambda i, j, k: (i, k)),
                pl.BlockSpec((tk_eff, tn_eff), lambda i, j, k: (k, j)),
                pl.BlockSpec((1, tn_eff), lambda i, j, k: (0, j)),
            ],
            out_specs=pl.BlockSpec((tm_eff, tn_eff), lambda i, j, k: (i, j)),
            scratch_shapes=[pltpu.VMEM((tm_eff, tn_eff), jnp.float32)],
        ),
        compiler_params=pltpu.CompilerParams(
            dimension_semantics=("parallel", "parallel", "arbitrary"),
            vmem_limit_bytes=int(vmem_limit)),
        cost_estimate=pl.CostEstimate(
            flops=int(flops),
            transcendentals=int(M * N) if apply_gelu else 0,
            bytes_accessed=int(bytes_accessed)),
    )(x2d, w, b2d)


# ---------------------------------------------------------------------------
# tiled path, L2 + L3 fused: out = gelu(x @ W2 + b2) @ W3 + b3, W3 resident
# ---------------------------------------------------------------------------
def _matmul_gelu_matmul_kernel(x_ref, w2_ref, b2_ref, w3_ref, b3_ref, o_ref,
                               acc2_ref, acc3_ref, *, block_n):
    j = pl.program_id(1)
    k = pl.program_id(2)
    nj = pl.num_programs(1)
    nk = pl.num_programs(2)

    @pl.when(jnp.logical_and(j == 0, k == 0))
    def _():
        acc3_ref[...] = jnp.zeros_like(acc3_ref)

    @pl.when(k == 0)
    def _():
        acc2_ref[...] = jnp.zeros_like(acc2_ref)

    acc2_ref[...] += jnp.dot(x_ref[...], w2_ref[...],
                             preferred_element_type=jnp.float32)

    @pl.when(k == nk - 1)
    def _():
        h = _gelu(acc2_ref[...] + b2_ref[...].astype(jnp.float32))
        off = pl.multiple_of(j * block_n, block_n)
        w3_blk = w3_ref[pl.ds(off, block_n), :]
        acc3_ref[...] += jnp.dot(h.astype(w3_ref.dtype), w3_blk,
                                 preferred_element_type=jnp.float32)

    @pl.when(jnp.logical_and(j == nj - 1, k == nk - 1))
    def _():
        o_ref[...] = (acc3_ref[...]
                      + b3_ref[...].astype(jnp.float32)).astype(o_ref.dtype)


def _l2l3_fused_estimate(M, H, D, tm, tn, tk, isz, out_isz, budget):
    tm_eff = min(tm, _round_up(M, 8))
    tn_eff = _pick_tile(D, tn)
    tk_eff = _choose_tk(H, tm_eff, tn_eff, isz, tk, budget)
    return (2 * tm_eff * tk_eff * isz          # x tiles (2 bufs)
            + 2 * tk_eff * tn_eff * isz        # W2 tiles (2 bufs)
            + D * D * isz                      # W3 resident (1 buf)
            + 2 * (tn_eff + D) * 4             # bias tiles (f32)
            + tm_eff * tn_eff * (4 + isz)      # acc2 + bf16 copy of gelu(h2)
            + tm_eff * D * 4                   # acc3 (f32)
            + 2 * tm_eff * D * out_isz)        # out tiles (2 bufs)


def _tiled_linear2_fused_l3(x2d, w2, b2_2d, w3, b3_2d, *, out_dtype,
                            tm, tn, tk, budget, vmem_limit):
    M, H = x2d.shape
    D = w3.shape[1]
    isz = jnp.dtype(x2d.dtype).itemsize
    tm_eff = min(tm, _round_up(M, 8))
    tn_eff = _pick_tile(D, tn)
    tk_eff = _choose_tk(H, tm_eff, tn_eff, isz, tk, budget)

    kernel = functools.partial(_matmul_gelu_matmul_kernel, block_n=tn_eff)
    flops = 2 * M * (H * D + D * D)
    bytes_accessed = (x2d.nbytes + w2.nbytes + w3.nbytes + b2_2d.nbytes
                      + b3_2d.nbytes + M * D * jnp.dtype(out_dtype).itemsize)

    return pl.pallas_call(
        kernel,
        out_shape=jax.ShapeDtypeStruct((M, D), out_dtype),
        grid_spec=pltpu.PrefetchScalarGridSpec(
            num_scalar_prefetch=0,
            grid=(pl.cdiv(M, tm_eff), D // tn_eff, H // tk_eff),
            in_specs=[
                pl.BlockSpec((tm_eff, tk_eff), lambda i, j, k: (i, k)),
                pl.BlockSpec((tk_eff, tn_eff), lambda i, j, k: (k, j)),
                pl.BlockSpec((1, tn_eff), lambda i, j, k: (0, j)),
                _resident_spec((D, D)),        # W3 resident: no HBM round-trip
                _resident_spec((1, D)),
            ],
            out_specs=pl.BlockSpec((tm_eff, D), lambda i, j, k: (i, 0)),
            scratch_shapes=[pltpu.VMEM((tm_eff, tn_eff), jnp.float32),
                            pltpu.VMEM((tm_eff, D), jnp.float32)],
        ),
        compiler_params=pltpu.CompilerParams(
            dimension_semantics=("parallel", "arbitrary", "arbitrary"),
            vmem_limit_bytes=int(vmem_limit)),
        cost_estimate=pl.CostEstimate(
            flops=int(flops),
            transcendentals=int(M * D),
            bytes_accessed=int(bytes_accessed)),
    )(x2d, w2, b2_2d, w3, b3_2d)


# ---------------------------------------------------------------------------
# public wrapper
# ---------------------------------------------------------------------------
def fused_mlp_projector(fused_img_patches, w1, b1, w2, b2, w3, b3, *,
                        tm: int = 512, tn: int = 1024, tk: int = 512,
                        compute_dtype=jnp.bfloat16, out_dtype=None,
                        vmem_budget_bytes: int | None = None,
                        force_tiled: bool = False,
                        fuse_l3_in_tiled: bool | None = None):
    """y = L3(gelu(L2(gelu(L1(x))))), weights stored as (in_dim, out_dim)."""
    orig_shape = fused_img_patches.shape
    K1 = orig_shape[-1]
    out_dtype = out_dtype or fused_img_patches.dtype

    x2d = fused_img_patches.reshape(-1, K1)
    if compute_dtype is not None:          # bf16 by default: 2x MXU, half DMA
        x2d = x2d.astype(compute_dtype)
        w1, w2, w3 = (w.astype(compute_dtype) for w in (w1, w2, w3))

    H = w1.shape[1]
    D = w3.shape[1]
    M = x2d.shape[0]
    in_isz = jnp.dtype(x2d.dtype).itemsize
    w_isz = jnp.dtype(w1.dtype).itemsize
    out_isz = jnp.dtype(out_dtype).itemsize

    # Generation-aware VMEM budgeting (v5e/v6e: 128 MiB, v7x: 64 MiB per TC).
    cap = _vmem_capacity_bytes()
    budget = (cap * 3 // 4) if vmem_budget_bytes is None else int(vmem_budget_bytes)
    vmem_limit = _vmem_limit_from_capacity(cap)

    # Biases kept in f32: they are added onto the f32 accumulators.
    b1_2d = b1.reshape(1, -1).astype(jnp.float32)
    b2_2d = b2.reshape(1, -1).astype(jnp.float32)
    b3_2d = b3.reshape(1, -1).astype(jnp.float32)

    row_align = 16 if in_isz == 2 else 8

    # --- fused-path eligibility: shrink tm until the footprint fits ---------
    out2d = None
    use_fused = not force_tiled
    if use_fused:
        tm_fused = min(tm, _round_up(M, row_align))
        while (_fused_vmem_estimate(tm_fused, K1, H, D, in_isz, w_isz, out_isz)
               > budget and tm_fused > row_align):
            tm_fused = max(row_align, _round_up(tm_fused // 2, row_align))
        use_fused = (_fused_vmem_estimate(tm_fused, K1, H, D, in_isz, w_isz,
                                          out_isz) <= budget)
        if use_fused:
            # Megacore (v7x): keep >= 2 parallel grid steps when M allows.
            if pl.cdiv(M, tm_fused) < 2 and M >= 2 * row_align:
                tm_fused = _round_up(pl.cdiv(M, 2), row_align)
            try:
                out2d = _fused_call(x2d, w1, b1_2d, w2, b2_2d, w3, b3_2d,
                                    tm=tm_fused, out_dtype=out_dtype,
                                    vmem_limit=vmem_limit)
            except Exception:
                # Graceful degradation (e.g. single-buffered resident blocks
                # unsupported by this JAX/Mosaic): fall back to the tiled path.
                out2d = None

    if out2d is None:
        # Tiled fallback: weights streamed in large (M,N,K) tiles.
        h = _tiled_linear(x2d, w1, b1_2d, apply_gelu=True,
                          out_dtype=x2d.dtype, tm=tm, tn=tn, tk=tk,
                          budget=budget, vmem_limit=vmem_limit)
        fuse_l3 = fuse_l3_in_tiled
        if fuse_l3 is None:
            fuse_l3 = _l2l3_fused_estimate(M, H, D, tm, tn, tk, in_isz,
                                           out_isz, budget) <= budget
        if fuse_l3:
            try:
                out2d = _tiled_linear2_fused_l3(h, w2, b2_2d, w3, b3_2d,
                                                out_dtype=out_dtype,
                                                tm=tm, tn=tn, tk=tk,
                                                budget=budget,
                                                vmem_limit=vmem_limit)
            except Exception:
                out2d = None
        if out2d is None:
            h = _tiled_linear(h, w2, b2_2d, apply_gelu=True,
                              out_dtype=x2d.dtype, tm=tm, tn=tn, tk=tk,
                              budget=budget, vmem_limit=vmem_limit)
            out2d = _tiled_linear(h, w3, b3_2d, apply_gelu=False,
                                  out_dtype=out_dtype, tm=tm, tn=tn, tk=tk,
                                  budget=budget, vmem_limit=vmem_limit)

    return out2d.reshape(*orig_shape[:-1], D)


# ---------------------------------------------------------------------------
# demo / self-check
# ---------------------------------------------------------------------------
def _reference_mlp(x, w1, b1, w2, b2, w3, b3):
    h = jax.nn.gelu(x @ w1 + b1, approximate=True)
    h = jax.nn.gelu(h @ w2 + b2, approximate=True)
    return h @ w3 + b3


if __name__ == "__main__":
    # Small shapes consistent with the module.
    B, S = 2, 8                      # batch, num_patches
    fused_vision_dim, llm_dim = 32, 64
    hidden = fused_vision_dim * 4    # initial_projection_dim = 128

    key = jax.random.PRNGKey(0)
    kx, k1, k2, k3, k4, k5, k6 = jax.random.split(key, 7)

    def linear_init(kw, kb, fan_in, fan_out):
        bound = 1.0 / (fan_in ** 0.5)
        w = jax.random.uniform(kw, (fan_in, fan_out), jnp.float32,
                               minval=-bound, maxval=bound)
        b = jax.random.uniform(kb, (fan_out,), jnp.float32,
                               minval=-bound, maxval=bound)
        return w, b

    w1, b1 = linear_init(k1, k2, fused_vision_dim, hidden)
    w2, b2 = linear_init(k3, k4, hidden, llm_dim)
    w3, b3 = linear_init(k5, k6, llm_dim, llm_dim)

    x = jax.random.normal(kx, (B, S, fused_vision_dim), jnp.float32)

    ref = _reference_mlp(x, w1, b1, w2, b2, w3, b3)

    # Path 1: fused single-kernel MLP (weights resident in VMEM), bf16 compute.
    out_fused = jax.block_until_ready(
        fused_mlp_projector(x, w1, b1, w2, b2, w3, b3))
    assert out_fused.shape == (B, S, llm_dim)
    assert jnp.allclose(out_fused, ref, atol=3e-2, rtol=3e-2)

    # Path 2: tiled fallback with L3 fused into the L2 kernel (W3 resident).
    out_t23 = jax.block_until_ready(
        fused_mlp_projector(x, w1, b1, w2, b2, w3, b3, force_tiled=True))
    assert out_t23.shape == (B, S, llm_dim)
    assert jnp.allclose(out_t23, ref, atol=3e-2, rtol=3e-2)

    # Path 3: fully tiled fallback, one pallas_call per Linear.
    out_tiled = jax.block_until_ready(
        fused_mlp_projector(x, w1, b1, w2, b2, w3, b3, force_tiled=True,
                            fuse_l3_in_tiled=False))
    assert out_tiled.shape == (B, S, llm_dim)
    assert jnp.allclose(out_tiled, ref, atol=3e-2, rtol=3e-2)

    print("KERNEL_OK")
</pallas_src>

<mosaic_0001>
module attributes {stable_mosaic.version = 11 : i64} {
  func.func @_fused_mlp_kernel(%arg0: i32, %arg1: memref<16x32xbf16, #tpu.memory_space<vmem>>, %arg2: memref<32x128xbf16, #tpu.memory_space<vmem>>, %arg3: memref<1x128xf32, #tpu.memory_space<vmem>>, %arg4: memref<128x64xbf16, #tpu.memory_space<vmem>>, %arg5: memref<1x64xf32, #tpu.memory_space<vmem>>, %arg6: memref<64x64xbf16, #tpu.memory_space<vmem>>, %arg7: memref<1x64xf32, #tpu.memory_space<vmem>>, %arg8: memref<16x64xf32, #tpu.memory_space<vmem>>) attributes {dimension_semantics = [#tpu.dimension_semantics<parallel>], iteration_bounds = array<i64: 1>, scalar_prefetch = 0 : i64, scratch_operands = 0 : i64, tpu.core_type = #tpu.core_type<tc>, window_params = [{transform_indices = @transform_0, window_bounds = array<i64: 16, 32>}, {pipeline_mode = #tpu.pipeline_mode<synchronous>, transform_indices = @transform_1, window_bounds = array<i64: 32, 128>}, {pipeline_mode = #tpu.pipeline_mode<synchronous>, transform_indices = @transform_2, window_bounds = array<i64: 1, 128>}, {pipeline_mode = #tpu.pipeline_mode<synchronous>, transform_indices = @transform_3, window_bounds = array<i64: 128, 64>}, {pipeline_mode = #tpu.pipeline_mode<synchronous>, transform_indices = @transform_4, window_bounds = array<i64: 1, 64>}, {pipeline_mode = #tpu.pipeline_mode<synchronous>, transform_indices = @transform_5, window_bounds = array<i64: 64, 64>}, {pipeline_mode = #tpu.pipeline_mode<synchronous>, transform_indices = @transform_6, window_bounds = array<i64: 1, 64>}, {transform_indices = @transform_7, window_bounds = array<i64: 16, 64>}]} {
    %c0 = arith.constant 0 : index
    %c0_0 = arith.constant 0 : index
    %0 = vector.load %arg1[%c0, %c0_0] : memref<16x32xbf16, #tpu.memory_space<vmem>>, vector<16x32xbf16>
    %c0_1 = arith.constant 0 : index
    %c0_2 = arith.constant 0 : index
    %1 = vector.load %arg2[%c0_1, %c0_2] : memref<32x128xbf16, #tpu.memory_space<vmem>>, vector<32x128xbf16>
    %cst = arith.constant dense<0.000000e+00> : vector<16x128xf32>
    %2 = tpu.matmul %0, %1, %cst {dimension_numbers = #tpu.dot_dimension_numbers<[1], [0], [0], [1], [0, 0, 1, 1], [], []>} : vector<16x32xbf16>, vector<32x128xbf16>, vector<16x128xf32> -> vector<16x128xf32>
    %c0_3 = arith.constant 0 : index
    %c0_4 = arith.constant 0 : index
    %3 = vector.load %arg3[%c0_3, %c0_4] : memref<1x128xf32, #tpu.memory_space<vmem>>, vector<1x128xf32>
    %4 = vector.broadcast %3 : vector<1x128xf32> to vector<16x128xf32>
    %5 = arith.addf %2, %4 : vector<16x128xf32>
    %6 = arith.mulf %5, %5 : vector<16x128xf32>
    %7 = arith.mulf %5, %6 : vector<16x128xf32>
    %cst_5 = arith.constant 4.471500e-02 : f32
    %8 = vector.broadcast %cst_5 : f32 to vector<16x128xf32>
    %9 = arith.mulf %8, %7 : vector<16x128xf32>
    %10 = arith.addf %5, %9 : vector<16x128xf32>
    %cst_6 = arith.constant 0.797884583 : f32
    %11 = vector.broadcast %cst_6 : f32 to vector<16x128xf32>
    %12 = arith.mulf %11, %10 : vector<16x128xf32>
    %13 = math.tanh %12 : vector<16x128xf32>
    %cst_7 = arith.constant 1.000000e+00 : f32
    %14 = vector.broadcast %cst_7 : f32 to vector<16x128xf32>
    %15 = arith.addf %14, %13 : vector<16x128xf32>
    %cst_8 = arith.constant 5.000000e-01 : f32
    %16 = vector.broadcast %cst_8 : f32 to vector<16x128xf32>
    %17 = arith.mulf %16, %15 : vector<16x128xf32>
    %18 = arith.mulf %5, %17 : vector<16x128xf32>
    %19 = arith.truncf %18 : vector<16x128xf32> to vector<16x128xbf16>
    %c0_9 = arith.constant 0 : index
    %c0_10 = arith.constant 0 : index
    %20 = vector.load %arg4[%c0_9, %c0_10] : memref<128x64xbf16, #tpu.memory_space<vmem>>, vector<128x64xbf16>
    %cst_11 = arith.constant dense<0.000000e+00> : vector<16x64xf32>
    %21 = tpu.matmul %19, %20, %cst_11 {dimension_numbers = #tpu.dot_dimension_numbers<[1], [0], [0], [1], [0, 0, 1, 1], [], []>} : vector<16x128xbf16>, vector<128x64xbf16>, vector<16x64xf32> -> vector<16x64xf32>
    %c0_12 = arith.constant 0 : index
    %c0_13 = arith.constant 0 : index
    %22 = vector.load %arg5[%c0_12, %c0_13] : memref<1x64xf32, #tpu.memory_space<vmem>>, vector<1x64xf32>
    %23 = vector.broadcast %22 : vector<1x64xf32> to vector<16x64xf32>
    %24 = arith.addf %21, %23 : vector<16x64xf32>
    %25 = arith.mulf %24, %24 : vector<16x64xf32>
    %26 = arith.mulf %24, %25 : vector<16x64xf32>
    %cst_14 = arith.constant 4.471500e-02 : f32
    %27 = vector.broadcast %cst_14 : f32 to vector<16x64xf32>
    %28 = arith.mulf %27, %26 : vector<16x64xf32>
    %29 = arith.addf %24, %28 : vector<16x64xf32>
    %cst_15 = arith.constant 0.797884583 : f32
    %30 = vector.broadcast %cst_15 : f32 to vector<16x64xf32>
    %31 = arith.mulf %30, %29 : vector<16x64xf32>
    %32 = math.tanh %31 : vector<16x64xf32>
    %cst_16 = arith.constant 1.000000e+00 : f32
    %33 = vector.broadcast %cst_16 : f32 to vector<16x64xf32>
    %34 = arith.addf %33, %32 : vector<16x64xf32>
    %cst_17 = arith.constant 5.000000e-01 : f32
    %35 = vector.broadcast %cst_17 : f32 to vector<16x64xf32>
    %36 = arith.mulf %35, %34 : vector<16x64xf32>
    %37 = arith.mulf %24, %36 : vector<16x64xf32>
    %38 = arith.truncf %37 : vector<16x64xf32> to vector<16x64xbf16>
    %c0_18 = arith.constant 0 : index
    %c0_19 = arith.constant 0 : index
    %39 = vector.load %arg6[%c0_18, %c0_19] : memref<64x64xbf16, #tpu.memory_space<vmem>>, vector<64x64xbf16>
    %cst_20 = arith.constant dense<0.000000e+00> : vector<16x64xf32>
    %40 = tpu.matmul %38, %39, %cst_20 {dimension_numbers = #tpu.dot_dimension_numbers<[1], [0], [0], [1], [0, 0, 1, 1], [], []>} : vector<16x64xbf16>, vector<64x64xbf16>, vector<16x64xf32> -> vector<16x64xf32>
    %c0_21 = arith.constant 0 : index
    %c0_22 = arith.constant 0 : index
    %41 = vector.load %arg7[%c0_21, %c0_22] : memref<1x64xf32, #tpu.memory_space<vmem>>, vector<1x64xf32>
    %42 = vector.broadcast %41 : vector<1x64xf32> to vector<16x64xf32>
    %43 = arith.addf %40, %42 : vector<16x64xf32>
    %c0_23 = arith.constant 0 : index
    %c0_24 = arith.constant 0 : index
    %44 = vector.load %arg8[%c0_23, %c0_24] : memref<16x64xf32, #tpu.memory_space<vmem>>, vector<16x64xf32>
    tpu.vector_store %arg8[%c0_23, %c0_24], %43 {strides = array<i32>} : memref<16x64xf32, #tpu.memory_space<vmem>>, vector<16x64xf32>,
    return
  }
  func.func @transform_0(%arg0: i32) -> (i32, i32) {
    %c0_i32 = arith.constant 0 : i32
    %c0_i32_0 = arith.constant 0 : i32
    return %arg0, %c0_i32 : i32, i32
  }
  func.func @transform_1(%arg0: i32) -> (i32, i32) {
    %c0_i32 = arith.constant 0 : i32
    %c0_i32_0 = arith.constant 0 : i32
    %c0_i32_1 = arith.constant 0 : i32
    return %c0_i32, %c0_i32_0 : i32, i32
  }
  func.func @transform_2(%arg0: i32) -> (i32, i32) {
    %c0_i32 = arith.constant 0 : i32
    %c0_i32_0 = arith.constant 0 : i32
    %c0_i32_1 = arith.constant 0 : i32
    return %c0_i32, %c0_i32_0 : i32, i32
  }
  func.func @transform_3(%arg0: i32) -> (i32, i32) {
    %c0_i32 = arith.constant 0 : i32
    %c0_i32_0 = arith.constant 0 : i32
    %c0_i32_1 = arith.constant 0 : i32
    return %c0_i32, %c0_i32_0 : i32, i32
  }
  func.func @transform_4(%arg0: i32) -> (i32, i32) {
    %c0_i32 = arith.constant 0 : i32
    %c0_i32_0 = arith.constant 0 : i32
    %c0_i32_1 = arith.constant 0 : i32
    return %c0_i32, %c0_i32_0 : i32, i32
  }
  func.func @transform_5(%arg0: i32) -> (i32, i32) {
    %c0_i32 = arith.constant 0 : i32
    %c0_i32_0 = arith.constant 0 : i32
    %c0_i32_1 = arith.constant 0 : i32
    return %c0_i32, %c0_i32_0 : i32, i32
  }
  func.func @transform_6(%arg0: i32) -> (i32, i32) {
    %c0_i32 = arith.constant 0 : i32
    %c0_i32_0 = arith.constant 0 : i32
    %c0_i32_1 = arith.constant 0 : i32
    return %c0_i32, %c0_i32_0 : i32, i32
  }
  func.func @transform_7(%arg0: i32) -> (i32, i32) {
    %c0_i32 = arith.constant 0 : i32
    %c0_i32_0 = arith.constant 0 : i32
    return %arg0, %c0_i32 : i32, i32
  }
}

module attributes {stable_mosaic.version = 11 : i64} {
  func.func @_matmul_bias_act_kernel(%arg0: i32, %arg1: i32, %arg2: i32, %arg3: memref<16x32xbf16, #tpu.memory_space<vmem>>, %arg4: memref<32x128xbf16, #tpu.memory_space<vmem>>, %arg5: memref<1x128xf32, #tpu.memory_space<vmem>>, %arg6: memref<16x128xbf16, #tpu.memory_space<vmem>>, %arg7: memref<16x128xf32, #tpu.memory_space<vmem>>) attributes {dimension_semantics = [#tpu.dimension_semantics<parallel>, #tpu.dimension_semantics<parallel>, #tpu.dimension_semantics<arbitrary>], iteration_bounds = array<i64: 1, 1, 1>, scalar_prefetch = 0 : i64, scratch_operands = 1 : i64, tpu.core_type = #tpu.core_type<tc>, window_params = [{transform_indices = @transform_0, window_bounds = array<i64: 16, 32>}, {transform_indices = @transform_1, window_bounds = array<i64: 32, 128>}, {transform_indices = @transform_2, window_bounds = array<i64: 1, 128>}, {transform_indices = @transform_3, window_bounds = array<i64: 16, 128>}]} {
    %c0_i32 = arith.constant 0 : i32
    %0 = arith.cmpi eq, %arg2, %c0_i32 : i32
    %1 = arith.extui %0 : i1 to i32
    %c0_i32_0 = arith.constant 0 : i32
    %2 = arith.cmpi ne, %1, %c0_i32_0 : i32
    scf.if %2 {
      %cst_10 = arith.constant 0.000000e+00 : f32
      %12 = vector.broadcast %cst_10 : f32 to vector<16x128xf32>
      %c0_11 = arith.constant 0 : index
      %c0_12 = arith.constant 0 : index
      %13 = vector.load %arg7[%c0_11, %c0_12] : memref<16x128xf32, #tpu.memory_space<vmem>>, vector<16x128xf32>
      tpu.vector_store %arg7[%c0_11, %c0_12], %12 {strides = array<i32>} : memref<16x128xf32, #tpu.memory_space<vmem>>, vector<16x128xf32>,
    } else {
    }
    %c0 = arith.constant 0 : index
    %c0_1 = arith.constant 0 : index
    %3 = vector.load %arg7[%c0, %c0_1] : memref<16x128xf32, #tpu.memory_space<vmem>>, vector<16x128xf32>
    %c0_2 = arith.constant 0 : index
    %c0_3 = arith.constant 0 : index
    %4 = vector.load %arg3[%c0_2, %c0_3] : memref<16x32xbf16, #tpu.memory_space<vmem>>, vector<16x32xbf16>
    %c0_4 = arith.constant 0 : index
    %c0_5 = arith.constant 0 : index
    %5 = vector.load %arg4[%c0_4, %c0_5] : memref<32x128xbf16, #tpu.memory_space<vmem>>, vector<32x128xbf16>
    %cst = arith.constant dense<0.000000e+00> : vector<16x128xf32>
    %6 = tpu.matmul %4, %5, %cst {dimension_numbers = #tpu.dot_dimension_numbers<[1], [0], [0], [1], [0, 0, 1, 1], [], []>} : vector<16x32xbf16>, vector<32x128xbf16>, vector<16x128xf32> -> vector<16x128xf32>
    %7 = arith.addf %3, %6 : vector<16x128xf32>
    %c0_6 = arith.constant 0 : index
    %c0_7 = arith.constant 0 : index
    %8 = vector.load %arg7[%c0_6, %c0_7] : memref<16x128xf32, #tpu.memory_space<vmem>>, vector<16x128xf32>
    tpu.vector_store %arg7[%c0_6, %c0_7], %7 {strides = array<i32>} : memref<16x128xf32, #tpu.memory_space<vmem>>, vector<16x128xf32>,
    %c0_i32_8 = arith.constant 0 : i32
    %9 = arith.cmpi eq, %arg2, %c0_i32_8 : i32
    %10 = arith.extui %9 : i1 to i32
    %c0_i32_9 = arith.constant 0 : i32
    %11 = arith.cmpi ne, %10, %c0_i32_9 : i32
    scf.if %11 {
      %c0_10 = arith.constant 0 : index
      %c0_11 = arith.constant 0 : index
      %12 = vector.load %arg7[%c0_10, %c0_11] : memref<16x128xf32, #tpu.memory_space<vmem>>, vector<16x128xf32>
      %c0_12 = arith.constant 0 : index
      %c0_13 = arith.constant 0 : index
      %13 = vector.load %arg5[%c0_12, %c0_13] : memref<1x128xf32, #tpu.memory_space<vmem>>, vector<1x128xf32>
      %14 = vector.broadcast %13 : vector<1x128xf32> to vector<16x128xf32>
      %15 = arith.addf %12, %14 : vector<16x128xf32>
      %16 = arith.mulf %15, %15 : vector<16x128xf32>
      %17 = arith.mulf %15, %16 : vector<16x128xf32>
      %cst_14 = arith.constant 4.471500e-02 : f32
      %18 = vector.broadcast %cst_14 : f32 to vector<16x128xf32>
      %19 = arith.mulf %18, %17 : vector<16x128xf32>
      %20 = arith.addf %15, %19 : vector<16x128xf32>
      %cst_15 = arith.constant 0.797884583 : f32
      %21 = vector.broadcast %cst_15 : f32 to vector<16x128xf32>
      %22 = arith.mulf %21, %20 : vector<16x128xf32>
      %23 = math.tanh %22 : vector<16x128xf32>
      %cst_16 = arith.constant 1.000000e+00 : f32
      %24 = vector.broadcast %cst_16 : f32 to vector<16x128xf32>
      %25 = arith.addf %24, %23 : vector<16x128xf32>
      %cst_17 = arith.constant 5.000000e-01 : f32
      %26 = vector.broadcast %cst_17 : f32 to vector<16x128xf32>
      %27 = arith.mulf %26, %25 : vector<16x128xf32>
      %28 = arith.mulf %15, %27 : vector<16x128xf32>
      %29 = arith.truncf %28 : vector<16x128xf32> to vector<16x128xbf16>
      %c0_18 = arith.constant 0 : index
      %c0_19 = arith.constant 0 : index
      %30 = vector.load %arg6[%c0_18, %c0_19] : memref<16x128xbf16, #tpu.memory_space<vmem>>, vector<16x128xbf16>
      tpu.vector_store %arg6[%c0_18, %c0_19], %29 {strides = array<i32>} : memref<16x128xbf16, #tpu.memory_space<vmem>>, vector<16x128xbf16>,
    } else {
    }
    return
  }
  func.func @transform_0(%arg0: i32, %arg1: i32, %arg2: i32) -> (i32, i32) {
    %c0_i32 = arith.constant 0 : i32
    return %arg0, %arg2 : i32, i32
  }
  func.func @transform_1(%arg0: i32, %arg1: i32, %arg2: i32) -> (i32, i32) {
    %c0_i32 = arith.constant 0 : i32
    return %arg2, %arg1 : i32, i32
  }
  func.func @transform_2(%arg0: i32, %arg1: i32, %arg2: i32) -> (i32, i32) {
    %c0_i32 = arith.constant 0 : i32
    %c0_i32_0 = arith.constant 0 : i32
    return %c0_i32, %arg1 : i32, i32
  }
  func.func @transform_3(%arg0: i32, %arg1: i32, %arg2: i32) -> (i32, i32) {
    %c0_i32 = arith.constant 0 : i32
    return %arg0, %arg1 : i32, i32
  }
}

</mosaic_0001>

<llo_original>
// kernel: tpu_custom_call.1
$region0: #{tpu_custom_call.1}
  #allocation0 [shape = 'u32[]', space=smem, size = 0x4, offset = 0x4, fixed_abs, tag = 'smem constant byte address 0x4 - core index']
  #allocation1 [shape = 'u32[72,128]{1,0:T(1,128)}', space=vmem, size = 0x9000, scoped, tag = 'internal scratch']
  %s0 = inlined_call_operand.vmem [shape: bf16[16,32], index: 0, kind: input, shape index: {}]
  %s1 = inlined_call_operand.vmem [shape: bf16[32,128], index: 1, kind: input, shape index: {}]
  %s2 = inlined_call_operand.vmem [shape: f32[1,128], index: 2, kind: input, shape index: {}]
  %s3 = inlined_call_operand.vmem [shape: bf16[128,64], index: 3, kind: input, shape index: {}]
  %s4 = inlined_call_operand.vmem [shape: f32[1,64], index: 4, kind: input, shape index: {}]
  %s5 = inlined_call_operand.vmem [shape: bf16[64,64], index: 5, kind: input, shape index: {}]
  %s6 = inlined_call_operand.vmem [shape: f32[1,64], index: 6, kind: input, shape index: {}]
  %s7 = inlined_call_operand.hbm [shape: f32[16,64], index: 7, kind: output, shape index: {}]
  %s8 = sld [smem:[#allocation0]]
  $region38: #{tpu_custom_call.1} parent=0
    _
  %s10 = ssub.s32 1, %s8
  %s11 = scalar_select 0, %s10, %s8
  $region1: #{tpu_custom_call.1} parent=0
    #allocation2 [shape = 'u8[8192]{0}', space=vmem, size = 0x2000, scoped, tag = 'output window, operand 0, single buffered']
    #allocation3 [shape = 's32[1]{0}', space=sflag, size = 0x4, scoped, tag = 'scoped memory for tpu_custom_call.1']
    %12 = vsyncpa [#allocation3], 0
    // Predicated region
    $region2: #{tpu_custom_call.1} parent=1 // pred_check
      _
    $region3: #{tpu_custom_call.1} parent=1 // pred_check_branch
      %14 = sbr.rel (0) target = $region5
    $region4: #{tpu_custom_call.1} parent=1 // pred_region
      _
    $region5: #{tpu_custom_call.1} parent=1 // pred_fallthru
      _
    // Predicated region
    $region6: #{tpu_custom_call.1} parent=1 // pred_check
      _
    $region7: #{tpu_custom_call.1} parent=1 // pred_check_branch
      %16 = sbr.rel (0) target = $region9
    $region8: #{tpu_custom_call.1} parent=1 // pred_region
      _
    $region9: #{tpu_custom_call.1} parent=1 // pred_fallthru
      _
    // Predicated region
    $region10: #{tpu_custom_call.1} parent=1 // pred_check
      _
    $region11: #{tpu_custom_call.1} parent=1 // pred_check_branch
      %18 = sbr.rel (0) target = $region13
    $region12: #{tpu_custom_call.1} parent=1 // pred_region
      _
    $region13: #{tpu_custom_call.1} parent=1 // pred_fallthru
      _
    // Predicated region
    $region14: #{tpu_custom_call.1} parent=1 // pred_check
      _
    $region15: #{tpu_custom_call.1} parent=1 // pred_check_branch
      %20 = sbr.rel (0) target = $region17
    $region16: #{tpu_custom_call.1} parent=1 // pred_region
      _
    $region17: #{tpu_custom_call.1} parent=1 // pred_fallthru
      _
    // Predicated region
    $region18: #{tpu_custom_call.1} parent=1 // pred_check
      _
    $region19: #{tpu_custom_call.1} parent=1 // pred_check_branch
      %22 = sbr.rel (0) target = $region21
    $region20: #{tpu_custom_call.1} parent=1 // pred_region
      _
    $region21: #{tpu_custom_call.1} parent=1 // pred_fallthru
      _
    // Predicated region
    $region22: #{tpu_custom_call.1} parent=1 // pred_check
      _
    $region23: #{tpu_custom_call.1} parent=1 // pred_check_branch
      %24 = sbr.rel (0) target = $region25
    $region24: #{tpu_custom_call.1} parent=1 // pred_region
      _
    $region25: #{tpu_custom_call.1} parent=1 // pred_fallthru
      _
    // Predicated region
    $region26: #{tpu_custom_call.1} parent=1 // pred_check
      _
    $region27: #{tpu_custom_call.1} parent=1 // pred_check_branch
      %26 = sbr.rel (0) target = $region29
    $region28: #{tpu_custom_call.1} parent=1 // pred_region
      _
    $region29: #{tpu_custom_call.1} parent=1 // pred_fallthru
      _
    %v28 = vld [vmem:[%s0] sm:$0xf]
    %v29 = vld [vmem:[%s0 + $0x4] sm:$0xf]
    %v30 = vld [vmem:[%s1] sm:$0xf]
    %v31 = vld [vmem:[%s1 + $0x4] sm:$0xf]
    %v32 = vld [vmem:[%s1 + $0x8] sm:$0xf]
    %v33 = vld [vmem:[%s1 + $0xc] sm:$0xf]
    %v34 = vld [vmem:[%s2] sm:$0x1]
    %v36 = vperm.slane %v34, 0
    %v40 = vunpack.c.l.b16 %v28
    %v41 = vunpack.c.l.b16 %v29
    %v42 = vpack.c.b16 %v41, %v40
    %v47 = vunpack.c.l.b16 %v30
    %v48 = vunpack.c.l.b16 %v31
    %v49 = vunpack.c.l.b16 %v32
    %v50 = vunpack.c.l.b16 %v33
    %v51 = vpack.c.b16 %v48, %v47
    %v52 = vpack.c.b16 %v50, %v49
    %vm55 = vcmask 261120
    %v57 = vsel %vm55, %v42, 0
    %59 = vmatpush.bf16.msra.mxu0 0
    %60 = vmatpush.bf16.msra.mxu0 0
    %61 = vmatpush.bf16.msra.mxu0 0
    %62 = vmatpush.bf16.msra.mxu0 0
    %63 = vmatpush.bf16.msra.mxu0 0
    %64 = vmatpush.bf16.msra.mxu0 0
    %65 = vmatpush.bf16.msra.mxu0 %v52
    %66 = vmatpush.bf16.msra.mxu0 %v51
    %67 = vmatmul.bf16.gmra.mxu0 %v57
    %v68 = vpop.f32.mrf.mxu0
    %v69 = vadd.f32 %v36, %v68
    %v70 = vpop.f32.mrf.mxu0
    %v71 = vadd.f32 %v36, %v70
    %72 = vdwg.mxu0
    %v73 = vmul.f32 %v69, %v69
    %v74 = vmul.f32 %v71, %v71
    %v75 = vmul.f32 %v69, %v73
    %v76 = vmul.f32 %v71, %v74
    %v77 = vmul.f32 %v75, 0.044715
    %v78 = vmul.f32 %v76, 0.044715
    %v79 = vadd.f32 %v69, %v77
    %v80 = vadd.f32 %v71, %v78
    %v81 = vmul.f32 %v79, 0.7978846
    %v82 = vmul.f32 %v80, 0.7978846
    %v83 = vtanh.pop %v81
    %v84 = vtanh.pop %v82
    %v85 = vadd.f32 %v83, 1.0
    %v86 = vadd.f32 %v84, 1.0
    %v87 = vmul.f32 %v85, 0.5
    %v88 = vmul.f32 %v86, 0.5
    %v89 = vmul.f32 %v69, %v87
    %v90 = vmul.f32 %v71, %v88
    %v91 = vpack.c.bf16 %v90, %v89
    %v92 = vld [vmem:[%s3] sm:$0xf]
    %v93 = vld [vmem:[%s3 + $0x4] sm:$0xf]
    %v94 = vld [vmem:[%s3 + $0x8] sm:$0xf]
    %v95 = vld [vmem:[%s3 + $0xc] sm:$0xf]
    %v96 = vld [vmem:[%s3 + $0x10] sm:$0xf]
    %v97 = vld [vmem:[%s3 + $0x14] sm:$0xf]
    %v98 = vld [vmem:[%s3 + $0x18] sm:$0xf]
    %v99 = vld [vmem:[%s3 + $0x1c] sm:$0xf]
    %v100 = vld [vmem:[%s3 + $0x20] sm:$0xf]
    %v101 = vld [vmem:[%s3 + $0x24] sm:$0xf]
    %v102 = vld [vmem:[%s3 + $0x28] sm:$0xf]
    %v103 = vld [vmem:[%s3 + $0x2c] sm:$0xf]
    %v104 = vld [vmem:[%s3 + $0x30] sm:$0xf]
    %v105 = vld [vmem:[%s3 + $0x34] sm:$0xf]
    %v106 = vld [vmem:[%s3 + $0x38] sm:$0xf]
    %v107 = vld [vmem:[%s3 + $0x3c] sm:$0xf]
    %v108 = vld [vmem:[%s4] sm:$0x1]
    %v110 = vperm.slane %v108, 0
    %v128 = vunpack.c.l.b16 %v92
    %v129 = vunpack.c.l.b16 %v93
    %v130 = vunpack.c.l.b16 %v94
    %v131 = vunpack.c.l.b16 %v95
    %v132 = vunpack.c.l.b16 %v96
    %v133 = vunpack.c.l.b16 %v97
    %v134 = vunpack.c.l.b16 %v98
    %v135 = vunpack.c.l.b16 %v99
    %v136 = vunpack.c.l.b16 %v100
    %v137 = vunpack.c.l.b16 %v101
    %v138 = vunpack.c.l.b16 %v102
    %v139 = vunpack.c.l.b16 %v103
    %v140 = vunpack.c.l.b16 %v104
    %v141 = vunpack.c.l.b16 %v105
    %v142 = vunpack.c.l.b16 %v106
    %v143 = vunpack.c.l.b16 %v107
    %v144 = vpack.c.b16 %v129, %v128
    %v145 = vpack.c.b16 %v131, %v130
    %v146 = vpack.c.b16 %v133, %v132
    %v147 = vpack.c.b16 %v135, %v134
    %v148 = vpack.c.b16 %v137, %v136
    %v149 = vpack.c.b16 %v139, %v138
    %v150 = vpack.c.b16 %v141, %v140
    %v151 = vpack.c.b16 %v143, %v142
    %160 = vmatpush.bf16.msra.mxu0 %v151
    %161 = vmatpush.bf16.msra.mxu0 %v150
    %162 = vmatpush.bf16.msra.mxu0 %v149
    %163 = vmatpush.bf16.msra.mxu0 %v148
    %164 = vmatpush.bf16.msra.mxu0 %v147
    %165 = vmatpush.bf16.msra.mxu0 %v146
    %166 = vmatpush.bf16.msra.mxu0 %v145
    %167 = vmatpush.bf16.msra.mxu0 %v144
    %168 = vmatmul.bf16.gmra.mxu0 %v91
    %v169 = vpop.f32.mrf.mxu0
    %v170 = vadd.f32 %v110, %v169
    %v171 = vpop.f32.mrf.mxu0
    %v172 = vadd.f32 %v110, %v171
    %173 = vdwg.mxu0
    %v174 = vmul.f32 %v170, %v170
    %v175 = vmul.f32 %v172, %v172
    %v176 = vmul.f32 %v170, %v174
    %v177 = vmul.f32 %v172, %v175
    %v178 = vmul.f32 %v176, 0.044715
    %v179 = vmul.f32 %v177, 0.044715
    %v180 = vadd.f32 %v170, %v178
    %v181 = vadd.f32 %v172, %v179
    %v182 = vmul.f32 %v180, 0.7978846
    %v183 = vmul.f32 %v181, 0.7978846
    %v184 = vtanh.pop %v182
    %v185 = vtanh.pop %v183
    %v186 = vadd.f32 %v184, 1.0
    %v187 = vadd.f32 %v185, 1.0
    %v188 = vmul.f32 %v186, 0.5
    %v189 = vmul.f32 %v187, 0.5
    %v190 = vmul.f32 %v170, %v188
    %v191 = vmul.f32 %v172, %v189
    %v192 = vpack.c.bf16 %v191, %v190
    %v193 = vld [vmem:[%s5] sm:$0xf]
    %v194 = vld [vmem:[%s5 + $0x4] sm:$0xf]
    %v195 = vld [vmem:[%s5 + $0x8] sm:$0xf]
    %v196 = vld [vmem:[%s5 + $0xc] sm:$0xf]
    %v197 = vld [vmem:[%s5 + $0x10] sm:$0xf]
    %v198 = vld [vmem:[%s5 + $0x14] sm:$0xf]
    %v199 = vld [vmem:[%s5 + $0x18] sm:$0xf]
    %v200 = vld [vmem:[%s5 + $0x1c] sm:$0xf]
    %v201 = vld [vmem:[%s6] sm:$0x1]
    %v203 = vperm.slane %v201, 0
    %v213 = vunpack.c.l.b16 %v193
    %v214 = vunpack.c.l.b16 %v194
    %v215 = vunpack.c.l.b16 %v195
    %v216 = vunpack.c.l.b16 %v196
    %v217 = vunpack.c.l.b16 %v197
    %v218 = vunpack.c.l.b16 %v198
    %v219 = vunpack.c.l.b16 %v199
    %v220 = vunpack.c.l.b16 %v200
    %v221 = vpack.c.b16 %v214, %v213
    %v222 = vpack.c.b16 %v216, %v215
    %v223 = vpack.c.b16 %v218, %v217
    %v224 = vpack.c.b16 %v220, %v219
    %vm229 = vcmask 523264
    %v231 = vsel %vm229, %v192, 0
    %233 = vmatpush.bf16.msra.mxu0 0
    %234 = vmatpush.bf16.msra.mxu0 0
    %235 = vmatpush.bf16.msra.mxu0 0
    %236 = vmatpush.bf16.msra.mxu0 0
    %237 = vmatpush.bf16.msra.mxu0 %v224
    %238 = vmatpush.bf16.msra.mxu0 %v223
    %239 = vmatpush.bf16.msra.mxu0 %v222
    %240 = vmatpush.bf16.msra.mxu0 %v221
    %241 = vmatmul.bf16.gmra.mxu0 %v231
    %v242 = vpop.f32.mrf.mxu0
    %v243 = vadd.f32 %v203, %v242
    %v244 = vpop.f32.mrf.mxu0
    %v245 = vadd.f32 %v203, %v244
    %246 = vdwg.mxu0
    %247 = vst.msk [vmem:[#allocation2] sm:$0xff] %vm229, %v243
    %248 = vst.msk [vmem:[#allocation2 + $0x8] sm:$0xff] %vm229, %v245
    // Predicated region
    $region30: #{tpu_custom_call.1} parent=1 // pred_check
      _
    $region31: #{tpu_custom_call.1} parent=1 // pred_check_branch
      %250 = sbr.rel (0) target = $region33
    $region32: #{tpu_custom_call.1} parent=1 // pred_region
      %252 = vsyncadd [#allocation3], 0
      %s253 = sshll.u32 [#allocation2], 4
      %s254 = int_to_ptr.vmem [resolvable:$true] %s253
      %s255 = sshll.u32 %s7, 4
      %s256 = int_to_ptr.hbm [resolvable:$true] %s255
      %261 = dma.vmem_to_hbm [thread:$0]  %s254, 256, %s256, [#allocation3], 128, 128, 8
    $region33: #{tpu_custom_call.1} parent=1 // pred_fallthru
      _
    // Predicated region
    $region34: #{tpu_custom_call.1} parent=1 // pred_check
      _
    $region35: #{tpu_custom_call.1} parent=1 // pred_check_branch
      %263 = sbr.rel (0) target = $region37
    $region36: #{tpu_custom_call.1} parent=1 // pred_region
      %265 = dma.done [#allocation3], 256
    $region37: #{tpu_custom_call.1} parent=1 // pred_fallthru
      _
    %266 = vsyncpa [#allocation3], 1

// kernel: tpu_custom_call.1
$region0: #{tpu_custom_call.1}
  #allocation0 [shape = 'u32[]', space=smem, size = 0x4, offset = 0x4, fixed_abs, tag = 'smem constant byte address 0x4 - core index']
  #allocation1 [shape = 'u32[72,128]{1,0:T(1,128)}', space=vmem, size = 0x9000, scoped, tag = 'internal scratch']
  #allocation2 [shape = 'f32[16,128]{1,0:T(8,128)}', space=vmem, size = 0x2000, scoped, tag = 'scratch operand']
  %s0 = inlined_call_operand.hbm [shape: bf16[16,32], index: 0, kind: input, shape index: {}]
  %s1 = inlined_call_operand.hbm [shape: bf16[32,128], index: 1, kind: input, shape index: {}]
  %s2 = inlined_call_operand.vmem [shape: f32[1,128], index: 2, kind: input, shape index: {}]
  %s3 = inlined_call_operand.hbm [shape: bf16[16,128], index: 3, kind: output, shape index: {}]
  %s4 = sld [smem:[#allocation0]]
  $region38: #{tpu_custom_call.1} parent=0
    _
  %s6 = ssub.s32 1, %s4
  %s7 = scalar_select 0, %s6, %s4
  $region1: #{tpu_custom_call.1} parent=0
    #allocation3 [shape = 'u8[4096]{0}', space=vmem, size = 0x1000, scoped, tag = 'input window, operand 0, single buffered']
    #allocation4 [shape = 's32[1]{0}', space=sflag, size = 0x4, scoped, tag = 'scoped memory for tpu_custom_call.1']
    #allocation5 [shape = 's32[1]{0}', space=sflag, size = 0x4, scoped, tag = 'scoped memory for tpu_custom_call.1']
    #allocation6 [shape = 'u8[8192]{0}', space=vmem, size = 0x2000, scoped, tag = 'input window, operand 1, single buffered']
    #allocation7 [shape = 's32[1]{0}', space=sflag, size = 0x4, scoped, tag = 'scoped memory for tpu_custom_call.1']
    #allocation8 [shape = 'u8[4096]{0}', space=vmem, size = 0x1000, scoped, tag = 'output window, operand 0, single buffered']
    %8 = vsyncpa [#allocation4], 0
    %9 = vsyncpa [#allocation7], 0
    %10 = vsyncpa [#allocation5], 0
    // Predicated region
    $region2: #{tpu_custom_call.1} parent=1 // pred_check
      _
    $region3: #{tpu_custom_call.1} parent=1 // pred_check_branch
      %12 = sbr.rel (0) target = $region5
    $region4: #{tpu_custom_call.1} parent=1 // pred_region
      %14 = vsyncadd [#allocation4], 0
      %s15 = sshll.u32 %s0, 4
      %s16 = int_to_ptr.hbm [resolvable:$true] %s15
      %s17 = sshll.u32 [#allocation3], 4
      %s18 = int_to_ptr.vmem [resolvable:$true] %s17
      %23 = dma.hbm_to_vmem [thread:$0]  %s16, 128, %s18, [#allocation4], 64, 64, 4
    $region5: #{tpu_custom_call.1} parent=1 // pred_fallthru
      _
    // Predicated region
    $region6: #{tpu_custom_call.1} parent=1 // pred_check
      _
    $region7: #{tpu_custom_call.1} parent=1 // pred_check_branch
      %25 = sbr.rel (0) target = $region9
    $region8: #{tpu_custom_call.1} parent=1 // pred_region
      %27 = vsyncadd [#allocation7], 0
      %s28 = sshll.u32 %s1, 4
      %s29 = int_to_ptr.hbm [resolvable:$true] %s28
      %s30 = sshll.u32 [#allocation6], 4
      %s31 = int_to_ptr.vmem [resolvable:$true] %s30
      %36 = dma.hbm_to_vmem [thread:$0]  %s29, 256, %s31, [#allocation7], 64, 64, 4
    $region9: #{tpu_custom_call.1} parent=1 // pred_fallthru
      _
    // Predicated region
    $region10: #{tpu_custom_call.1} parent=1 // pred_check
      _
    $region11: #{tpu_custom_call.1} parent=1 // pred_check_branch
      %38 = sbr.rel (0) target = $region13
    $region12: #{tpu_custom_call.1} parent=1 // pred_region
      _
    $region13: #{tpu_custom_call.1} parent=1 // pred_fallthru
      _
    // Predicated region
    $region14: #{tpu_custom_call.1} parent=1 // pred_check
      _
    $region15: #{tpu_custom_call.1} parent=1 // pred_check_branch
      %40 = sbr.rel (0) target = $region17
    $region16: #{tpu_custom_call.1} parent=1 // pred_region
      %42 = dma.done [#allocation4], 128
    $region17: #{tpu_custom_call.1} parent=1 // pred_fallthru
      _
    // Predicated region
    $region18: #{tpu_custom_call.1} parent=1 // pred_check
      _
    $region19: #{tpu_custom_call.1} parent=1 // pred_check_branch
      %44 = sbr.rel (0) target = $region21
    $region20: #{tpu_custom_call.1} parent=1 // pred_region
      %46 = dma.done [#allocation7], 256
    $region21: #{tpu_custom_call.1} parent=1 // pred_fallthru
      _
    %p48 = scmp.eq.s32.totalorder 0, 0
    // Predicated region
    $region22: #{tpu_custom_call.1} parent=1 // pred_check
      %p49 = pneg %p48
    $region23: #{tpu_custom_call.1} parent=1 // pred_check_branch
      %51 = sbr.rel (%p49) target = $region25
    $region24: #{tpu_custom_call.1} parent=1 // pred_region
      %52 = vst [vmem:[#allocation2] sm:$0xff] 0.0
      %53 = vst [vmem:[#allocation2 + $0x8] sm:$0xff] 0.0
    $region25: #{tpu_custom_call.1} parent=1 // pred_fallthru
      _
    %v54 = vld [vmem:[#allocation2] sm:$0xff]
    %v55 = vld [vmem:[#allocation2 + $0x8] sm:$0xff]
    %v56 = vld [vmem:[#allocation3] sm:$0xf]
    %v57 = vld [vmem:[#allocation3 + $0x4] sm:$0xf]
    %v58 = vld [vmem:[#allocation6] sm:$0xf]
    %v59 = vld [vmem:[#allocation6 + $0x4] sm:$0xf]
    %v60 = vld [vmem:[#allocation6 + $0x8] sm:$0xf]
    %v61 = vld [vmem:[#allocation6 + $0xc] sm:$0xf]
    %v64 = vunpack.c.l.b16 %v56
    %v65 = vunpack.c.l.b16 %v57
    %v66 = vpack.c.b16 %v65, %v64
    %v71 = vunpack.c.l.b16 %v58
    %v72 = vunpack.c.l.b16 %v59
    %v73 = vunpack.c.l.b16 %v60
    %v74 = vunpack.c.l.b16 %v61
    %v75 = vpack.c.b16 %v72, %v71
    %v76 = vpack.c.b16 %v74, %v73
    %vm79 = vcmask 261120
    %v81 = vsel %vm79, %v66, 0
    %83 = vmatpush.bf16.msra.mxu0 0
    %84 = vmatpush.bf16.msra.mxu0 0
    %85 = vmatpush.bf16.msra.mxu0 0
    %86 = vmatpush.bf16.msra.mxu0 0
    %87 = vmatpush.bf16.msra.mxu0 0
    %88 = vmatpush.bf16.msra.mxu0 0
    %89 = vmatpush.bf16.msra.mxu0 %v76
    %90 = vmatpush.bf16.msra.mxu0 %v75
    %91 = vmatmul.bf16.gmra.mxu0 %v81
    %v92 = vpop.f32.mrf.mxu0
    %v93 = vadd.f32 0.0, %v92
    %v94 = vpop.f32.mrf.mxu0
    %v95 = vadd.f32 0.0, %v94
    %96 = vdwg.mxu0
    %v97 = vadd.f32 %v54, %v93
    %v98 = vadd.f32 %v55, %v95
    %99 = vst [vmem:[#allocation2] sm:$0xff] %v97
    %100 = vst [vmem:[#allocation2 + $0x8] sm:$0xff] %v98
    // Predicated region
    $region26: #{tpu_custom_call.1} parent=1 // pred_check
      %p101 = pneg %p48
    $region27: #{tpu_custom_call.1} parent=1 // pred_check_branch
      %103 = sbr.rel (%p101) target = $region29
    $region28: #{tpu_custom_call.1} parent=1 // pred_region
      %v104 = vld [vmem:[#allocation2] sm:$0xff]
      %v105 = vld [vmem:[#allocation2 + $0x8] sm:$0xff]
      %v106 = vld [vmem:[%s2] sm:$0x1]
      %v108 = vperm.slane %v106, 0
      %v110 = vadd.f32 %v104, %v108
      %v111 = vadd.f32 %v105, %v108
      %v112 = vmul.f32 %v110, %v110
      %v113 = vmul.f32 %v111, %v111
      %v114 = vmul.f32 %v110, %v112
      %v115 = vmul.f32 %v111, %v113
      %v116 = vmul.f32 %v114, 0.044715
      %v117 = vmul.f32 %v115, 0.044715
      %v118 = vadd.f32 %v110, %v116
      %v119 = vadd.f32 %v111, %v117
      %v120 = vmul.f32 %v118, 0.7978846
      %v121 = vmul.f32 %v119, 0.7978846
      %v122 = vtanh.pop %v120
      %v123 = vtanh.pop %v121
      %v124 = vadd.f32 %v122, 1.0
      %v125 = vadd.f32 %v123, 1.0
      %v126 = vmul.f32 %v124, 0.5
      %v127 = vmul.f32 %v125, 0.5
      %v128 = vmul.f32 %v110, %v126
      %v129 = vmul.f32 %v111, %v127
      %v130 = vpack.c.bf16 %v128, %v128
      %v131 = vpack.c.bf16 %v129, %v129
      %132 = vst [vmem:[#allocation8] sm:$0xf] %v130
      %133 = vst [vmem:[#allocation8 + $0x4] sm:$0xf] %v131
    $region29: #{tpu_custom_call.1} parent=1 // pred_fallthru
      _
    // Predicated region
    $region30: #{tpu_custom_call.1} parent=1 // pred_check
      _
    $region31: #{tpu_custom_call.1} parent=1 // pred_check_branch
      %135 = sbr.rel (0) target = $region33
    $region32: #{tpu_custom_call.1} parent=1 // pred_region
      %137 = vsyncadd [#allocation5], 0
      %s138 = sshll.u32 [#allocation8], 4
      %s139 = int_to_ptr.vmem [resolvable:$true] %s138
      %s140 = sshll.u32 %s3, 4
      %s141 = int_to_ptr.hbm [resolvable:$true] %s140
      %146 = dma.vmem_to_hbm [thread:$0]  %s139, 128, %s141, [#allocation5], 64, 64, 4
    $region33: #{tpu_custom_call.1} parent=1 // pred_fallthru
      _
    // Predicated region
    $region34: #{tpu_custom_call.1} parent=1 // pred_check
      _
    $region35: #{tpu_custom_call.1} parent=1 // pred_check_branch
      %148 = sbr.rel (0) target = $region37
    $region36: #{tpu_custom_call.1} parent=1 // pred_region
      %150 = dma.done [#allocation5], 128
    $region37: #{tpu_custom_call.1} parent=1 // pred_fallthru
      _
    %151 = vsyncpa [#allocation4], 1
    %152 = vsyncpa [#allocation7], 1
    %153 = vsyncpa [#allocation5], 1

</llo_original>
